<compile_context>
chip_gen: v5e
topology: v5e:2x2
jax: 0.10.0
libtpu: 0.0.40
codegen_flags: <defaults>
</compile_context>

<pallas_src>
import jax
import jax.numpy as jnp
from jax import lax
from jax.experimental import pallas as pl
from jax.experimental.pallas import tpu as pltpu


def _noisy_linear_kernel(x_ref, mu_w_ref, sigma_w_ref, eps_in_ref, eps_out_ref,
                         noisy_b_ref, o_ref):
    """One (i, j, k) grid step of y = x @ noisy_w.T + noisy_b.

    The f32 output block is resident across the k (reduction) axis, so it is
    used directly as the accumulator (no scratch, no final copy).
    """
    k = pl.program_id(2)

    @pl.when(k == 0)
    def _():
        o_ref[...] = jnp.zeros_like(o_ref)

    # Factorized noise tile built on the VPU: (tn,1)*(1,tk) -> (tn,tk), f32.
    # FMA in f32 (v5e has no bf16 VALU), then cast back to the weight storage
    # dtype so the MXU sees its native bf16 path when weights are bf16.
    w_dtype = mu_w_ref.dtype
    eps_w = eps_out_ref[...] * eps_in_ref[...]
    noisy_w = (mu_w_ref[...].astype(jnp.float32)
               + sigma_w_ref[...].astype(jnp.float32) * eps_w).astype(w_dtype)

    # Contract x (tm,tk) with noisy_w (tn,tk) along dim 1 of both -> (tm,tn).
    # The MXU consumes the transposed RHS natively (no in-kernel vxpose).
    o_ref[...] += lax.dot_general(
        x_ref[...].astype(w_dtype), noisy_w,
        dimension_numbers=(((1,), (1,)), ((), ())),
        preferred_element_type=jnp.float32)

    @pl.when(k == pl.num_programs(2) - 1)
    def _():
        o_ref[...] += noisy_b_ref[...]


def _linear_kernel(x_ref, w_ref, b_ref, o_ref):
    """Plain linear: eval path, or training with pre-materialized noisy_w."""
    k = pl.program_id(2)

    @pl.when(k == 0)
    def _():
        o_ref[...] = jnp.zeros_like(o_ref)

    o_ref[...] += lax.dot_general(
        x_ref[...].astype(w_ref.dtype), w_ref[...],
        dimension_numbers=(((1,), (1,)), ((), ())),
        preferred_element_type=jnp.float32)

    @pl.when(k == pl.num_programs(2) - 1)
    def _():
        o_ref[...] += b_ref[...]


def _round_up(x, m):
    return (x + m - 1) // m * m


def _pad2(a, rows, cols):
    pr, pc = rows - a.shape[0], cols - a.shape[1]
    if pr or pc:
        a = jnp.pad(a, ((0, pr), (0, pc)))
    return a


def noisy_linear(x, mu_w, sigma_w, eps_in, eps_out, mu_b, sigma_b,
                 training=True, *, tm=128, tn=512, tk=1024,
                 weight_dtype=jnp.bfloat16):
    """Pallas-backed NoisyLinear forward.

    x:       (B, I) f32
    mu_w, sigma_w: (O, I) f32 (streamed in `weight_dtype`, bf16 by default)
    eps_in:  (I,) f32   factorized noise (never outer-producted in HBM)
    eps_out: (O,) f32
    mu_b, sigma_b: (O,) f32
    """
    B, I = x.shape
    O = mu_w.shape[0]
    w_itemsize = jnp.dtype(weight_dtype).itemsize

    # ---- tile selection ---------------------------------------------------
    # x stays f32 (min sublane tile 8); weights stream in weight_dtype with
    # tn >= 128, comfortably above bf16's (16,128) min tile.
    tm = _round_up(min(tm, _round_up(B, 8)), 8)
    B_pad = _round_up(B, tm)

    O_128 = _round_up(O, 128)
    tn = _round_up(min(tn, O_128), 128)
    # v7x shards the "parallel" grid axes over 2 TensorCores; if the batch
    # fits a single tm tile, split the output dim so both cores get work.
    if B_pad // tm == 1 and tn >= O_128 and O_128 >= 256:
        tn = _round_up(O_128 // 2, 128)
    O_pad = _round_up(O, tn)

    tk = _round_up(min(tk, _round_up(I, 128)), 128)
    I_pad = _round_up(I, tk)

    grid = (B_pad // tm, O_pad // tn, I_pad // tk)

    x_p = _pad2(x.astype(jnp.float32), B_pad, I_pad)
    x_spec = pl.BlockSpec((tm, tk), lambda i, j, k: (i, k))
    w_spec = pl.BlockSpec((tn, tk), lambda i, j, k: (j, k))
    b_spec = pl.BlockSpec((1, tn), lambda i, j, k: (0, j))
    out_spec = pl.BlockSpec((tm, tn), lambda i, j, k: (i, j))

    cparams = pltpu.CompilerParams(
        dimension_semantics=("parallel", "parallel", "arbitrary"),
        vmem_limit_bytes=32 * 1024 * 1024)

    def run_linear(w, b):
        w_p = _pad2(w.astype(weight_dtype), O_pad, I_pad)
        b_p = _pad2(b.astype(jnp.float32).reshape(1, O), 1, O_pad)
        cost = pl.CostEstimate(
            flops=2 * B_pad * O_pad * I_pad,
            transcendentals=0,
            bytes_accessed=(4 * B_pad * I_pad * (O_pad // tn)          # x revisited per j tile
                            + w_itemsize * O_pad * I_pad * (B_pad // tm)  # w revisited per i tile
                            + 4 * B_pad * O_pad + 4 * O_pad))
        return pl.pallas_call(
            _linear_kernel,
            out_shape=jax.ShapeDtypeStruct((B_pad, O_pad), jnp.float32),
            grid_spec=pltpu.PrefetchScalarGridSpec(
                num_scalar_prefetch=0,
                grid=grid,
                in_specs=[x_spec, w_spec, b_spec],
                out_specs=out_spec),
            compiler_params=cparams,
            cost_estimate=cost,
        )(x_p, w_p, b_p)

    if not training:
        out = run_linear(mu_w, mu_b)
    else:
        # Bias noise is O(O): fold it in the wrapper -> single bias stream.
        noisy_b = mu_b + sigma_b * eps_out
        if B_pad // tm >= 4:
            # Compute-bound large-batch regime: materialize noisy_w once
            # (~3x O*I one-off traffic) instead of streaming mu_w + sigma_w
            # (2x O*I) for every batch tile, then reuse the plain kernel.
            noisy_w = mu_w + sigma_w * (eps_out[:, None] * eps_in[None, :])
            out = run_linear(noisy_w, noisy_b)
        else:
            mu_w_p = _pad2(mu_w.astype(weight_dtype), O_pad, I_pad)
            sigma_w_p = _pad2(sigma_w.astype(weight_dtype), O_pad, I_pad)
            eps_in_p = _pad2(eps_in.astype(jnp.float32).reshape(1, I), 1, I_pad)
            eps_out_p = _pad2(eps_out.astype(jnp.float32).reshape(O, 1), O_pad, 1)
            noisy_b_p = _pad2(noisy_b.astype(jnp.float32).reshape(1, O), 1, O_pad)

            cost = pl.CostEstimate(
                flops=2 * B_pad * O_pad * I_pad,
                transcendentals=0,
                bytes_accessed=(4 * B_pad * I_pad * (O_pad // tn)
                                + 2 * w_itemsize * O_pad * I_pad * (B_pad // tm)
                                + 4 * B_pad * O_pad
                                + 4 * (2 * O_pad + I_pad)))

            out = pl.pallas_call(
                _noisy_linear_kernel,
                out_shape=jax.ShapeDtypeStruct((B_pad, O_pad), jnp.float32),
                grid_spec=pltpu.PrefetchScalarGridSpec(
                    num_scalar_prefetch=0,
                    grid=grid,
                    in_specs=[
                        x_spec,                                          # x
                        w_spec,                                          # mu_w
                        w_spec,                                          # sigma_w
                        pl.BlockSpec((1, tk), lambda i, j, k: (0, k)),   # eps_in
                        pl.BlockSpec((tn, 1), lambda i, j, k: (j, 0)),   # eps_out
                        b_spec,                                          # noisy_b
                    ],
                    out_specs=out_spec),
                compiler_params=cparams,
                cost_estimate=cost,
            )(x_p, mu_w_p, sigma_w_p, eps_in_p, eps_out_p, noisy_b_p)

    return out[:B, :O].astype(x.dtype)


def scale_noise(key, size):
    # torch: x.sign() * x.abs().sqrt() with x ~ N(0, 1)
    x = jax.random.normal(key, (size,), dtype=jnp.float32)
    return jnp.sign(x) * jnp.sqrt(jnp.abs(x))


def init_noisy_linear_params(key, in_features, out_features, sigma_init=0.5):
    k = 1.0 / jnp.sqrt(jnp.float32(in_features))
    k_mu_w, k_mu_b, k_eps_in, k_eps_out = jax.random.split(key, 4)

    mu_w = jax.random.uniform(k_mu_w, (out_features, in_features),
                              minval=-k, maxval=k, dtype=jnp.float32)
    mu_b = jax.random.uniform(k_mu_b, (out_features,),
                              minval=-k, maxval=k, dtype=jnp.float32)
    sigma_val = sigma_init / jnp.sqrt(jnp.float32(in_features))
    sigma_w = jnp.full((out_features, in_features), sigma_val, dtype=jnp.float32)
    sigma_b = jnp.full((out_features,), sigma_val, dtype=jnp.float32)

    # Noise kept factorized; eps_w = outer(eps_out, eps_in) is built on-chip
    # per tile, never materialized in HBM (except on the large-batch path).
    eps_in = scale_noise(k_eps_in, in_features)      # (I,)
    eps_out = scale_noise(k_eps_out, out_features)   # (O,)
    return mu_w, mu_b, sigma_w, sigma_b, eps_in, eps_out


if __name__ == "__main__":
    key = jax.random.PRNGKey(0)
    k_param, k_x, k_x2 = jax.random.split(key, 3)

    batch, in_features, out_features = 8, 256, 256
    mu_w, mu_b, sigma_w, sigma_b, eps_in, eps_out = init_noisy_linear_params(
        k_param, in_features, out_features, sigma_init=0.5)
    x = jax.random.normal(k_x, (batch, in_features), dtype=jnp.float32)

    # Reference (same math as the PyTorch forward).
    eps_w_ref = jnp.outer(eps_out, eps_in)
    noisy_w_ref = mu_w + sigma_w * eps_w_ref
    noisy_b_ref = mu_b + sigma_b * eps_out
    y_train_ref = x @ noisy_w_ref.T + noisy_b_ref
    y_eval_ref = x @ mu_w.T + mu_b

    # 1) Exact f32 path, small tiles so the demo exercises multiple j and k
    #    grid steps (direct accumulation into the resident output block).
    y_f32 = noisy_linear(x, mu_w, sigma_w, eps_in, eps_out, mu_b, sigma_b,
                         training=True, tm=128, tn=128, tk=128,
                         weight_dtype=jnp.float32)
    y_f32 = jax.block_until_ready(y_f32)
    assert y_f32.shape == (batch, out_features)
    assert jnp.allclose(y_f32, y_train_ref, atol=1e-4, rtol=1e-4)

    # 2) Default perf config: bf16 weight streaming, f32 accumulation.
    y_bf16 = noisy_linear(x, mu_w, sigma_w, eps_in, eps_out, mu_b, sigma_b,
                          training=True)
    y_bf16 = jax.block_until_ready(y_bf16)
    assert jnp.allclose(y_bf16, y_train_ref, atol=1e-1, rtol=5e-2)

    # 3) Eval path (no sigma / eps streams).
    y_eval = noisy_linear(x, mu_w, sigma_w, eps_in, eps_out, mu_b, sigma_b,
                          training=False, weight_dtype=jnp.float32)
    y_eval = jax.block_until_ready(y_eval)
    assert jnp.allclose(y_eval, y_eval_ref, atol=1e-4, rtol=1e-4)

    # 4) Large-batch training path (B_pad/tm >= 4 -> pre-materialized noisy_w
    #    dispatched through the plain linear kernel).
    x_big = jax.random.normal(k_x2, (32, in_features), dtype=jnp.float32)
    y_big = noisy_linear(x_big, mu_w, sigma_w, eps_in, eps_out, mu_b, sigma_b,
                         training=True, tm=8, weight_dtype=jnp.float32)
    y_big = jax.block_until_ready(y_big)
    y_big_ref = x_big @ noisy_w_ref.T + noisy_b_ref
    assert jnp.allclose(y_big, y_big_ref, atol=1e-4, rtol=1e-4)

    print("KERNEL_OK")
</pallas_src>

<mosaic_0001>
module attributes {stable_mosaic.version = 11 : i64} {
  func.func @_noisy_linear_kernel(%arg0: i32, %arg1: i32, %arg2: i32, %arg3: memref<8x128xf32, #tpu.memory_space<vmem>>, %arg4: memref<128x128xf32, #tpu.memory_space<vmem>>, %arg5: memref<128x128xf32, #tpu.memory_space<vmem>>, %arg6: memref<1x128xf32, #tpu.memory_space<vmem>>, %arg7: memref<128x1xf32, #tpu.memory_space<vmem>>, %arg8: memref<1x128xf32, #tpu.memory_space<vmem>>, %arg9: memref<8x128xf32, #tpu.memory_space<vmem>>) attributes {dimension_semantics = [#tpu.dimension_semantics<parallel>, #tpu.dimension_semantics<parallel>, #tpu.dimension_semantics<arbitrary>], iteration_bounds = array<i64: 1, 2, 2>, scalar_prefetch = 0 : i64, scratch_operands = 0 : i64, tpu.core_type = #tpu.core_type<tc>, window_params = [{transform_indices = @transform_0, window_bounds = array<i64: 8, 128>}, {transform_indices = @transform_1, window_bounds = array<i64: 128, 128>}, {transform_indices = @transform_2, window_bounds = array<i64: 128, 128>}, {transform_indices = @transform_3, window_bounds = array<i64: 1, 128>}, {transform_indices = @transform_4, window_bounds = array<i64: 128, 1>}, {transform_indices = @transform_5, window_bounds = array<i64: 1, 128>}, {transform_indices = @transform_6, window_bounds = array<i64: 8, 128>}]} {
    %c0_i32 = arith.constant 0 : i32
    %0 = arith.cmpi eq, %arg2, %c0_i32 : i32
    %1 = arith.extui %0 : i1 to i32
    %c0_i32_0 = arith.constant 0 : i32
    %2 = arith.cmpi ne, %1, %c0_i32_0 : i32
    scf.if %2 {
      %cst_15 = arith.constant 0.000000e+00 : f32
      %20 = vector.broadcast %cst_15 : f32 to vector<8x128xf32>
      %c0_16 = arith.constant 0 : index
      %c0_17 = arith.constant 0 : index
      %21 = vector.load %arg9[%c0_16, %c0_17] : memref<8x128xf32, #tpu.memory_space<vmem>>, vector<8x128xf32>
      tpu.vector_store %arg9[%c0_16, %c0_17], %20 {strides = array<i32>} : memref<8x128xf32, #tpu.memory_space<vmem>>, vector<8x128xf32>,
    } else {
    }
    %c0 = arith.constant 0 : index
    %c0_1 = arith.constant 0 : index
    %3 = vector.load %arg7[%c0, %c0_1] : memref<128x1xf32, #tpu.memory_space<vmem>>, vector<128x1xf32>
    %c0_2 = arith.constant 0 : index
    %c0_3 = arith.constant 0 : index
    %4 = vector.load %arg6[%c0_2, %c0_3] : memref<1x128xf32, #tpu.memory_space<vmem>>, vector<1x128xf32>
    %5 = vector.broadcast %3 : vector<128x1xf32> to vector<128x128xf32>
    %6 = vector.broadcast %4 : vector<1x128xf32> to vector<128x128xf32>
    %7 = arith.mulf %5, %6 : vector<128x128xf32>
    %c0_4 = arith.constant 0 : index
    %c0_5 = arith.constant 0 : index
    %8 = vector.load %arg4[%c0_4, %c0_5] : memref<128x128xf32, #tpu.memory_space<vmem>>, vector<128x128xf32>
    %c0_6 = arith.constant 0 : index
    %c0_7 = arith.constant 0 : index
    %9 = vector.load %arg5[%c0_6, %c0_7] : memref<128x128xf32, #tpu.memory_space<vmem>>, vector<128x128xf32>
    %10 = arith.mulf %9, %7 : vector<128x128xf32>
    %11 = arith.addf %8, %10 : vector<128x128xf32>
    %c0_8 = arith.constant 0 : index
    %c0_9 = arith.constant 0 : index
    %12 = vector.load %arg9[%c0_8, %c0_9] : memref<8x128xf32, #tpu.memory_space<vmem>>, vector<8x128xf32>
    %c0_10 = arith.constant 0 : index
    %c0_11 = arith.constant 0 : index
    %13 = vector.load %arg3[%c0_10, %c0_11] : memref<8x128xf32, #tpu.memory_space<vmem>>, vector<8x128xf32>
    %cst = arith.constant dense<0.000000e+00> : vector<8x128xf32>
    %14 = tpu.matmul %13, %11, %cst {dimension_numbers = #tpu.dot_dimension_numbers<[1], [1], [0], [0], [0, 0, 1, 0], [], []>} : vector<8x128xf32>, vector<128x128xf32>, vector<8x128xf32> -> vector<8x128xf32>
    %15 = arith.addf %12, %14 : vector<8x128xf32>
    %c0_12 = arith.constant 0 : index
    %c0_13 = arith.constant 0 : index
    %16 = vector.load %arg9[%c0_12, %c0_13] : memref<8x128xf32, #tpu.memory_space<vmem>>, vector<8x128xf32>
    tpu.vector_store %arg9[%c0_12, %c0_13], %15 {strides = array<i32>} : memref<8x128xf32, #tpu.memory_space<vmem>>, vector<8x128xf32>,
    %c1_i32 = arith.constant 1 : i32
    %17 = arith.cmpi eq, %arg2, %c1_i32 : i32
    %18 = arith.extui %17 : i1 to i32
    %c0_i32_14 = arith.constant 0 : i32
    %19 = arith.cmpi ne, %18, %c0_i32_14 : i32
    scf.if %19 {
      %c0_15 = arith.constant 0 : index
      %c0_16 = arith.constant 0 : index
      %20 = vector.load %arg9[%c0_15, %c0_16] : memref<8x128xf32, #tpu.memory_space<vmem>>, vector<8x128xf32>
      %c0_17 = arith.constant 0 : index
      %c0_18 = arith.constant 0 : index
      %21 = vector.load %arg8[%c0_17, %c0_18] : memref<1x128xf32, #tpu.memory_space<vmem>>, vector<1x128xf32>
      %22 = vector.broadcast %21 : vector<1x128xf32> to vector<8x128xf32>
      %23 = arith.addf %20, %22 : vector<8x128xf32>
      %c0_19 = arith.constant 0 : index
      %c0_20 = arith.constant 0 : index
      %24 = vector.load %arg9[%c0_19, %c0_20] : memref<8x128xf32, #tpu.memory_space<vmem>>, vector<8x128xf32>
      tpu.vector_store %arg9[%c0_19, %c0_20], %23 {strides = array<i32>} : memref<8x128xf32, #tpu.memory_space<vmem>>, vector<8x128xf32>,
    } else {
    }
    return
  }
  func.func @transform_0(%arg0: i32, %arg1: i32, %arg2: i32) -> (i32, i32) {
    %c0_i32 = arith.constant 0 : i32
    return %arg0, %arg2 : i32, i32
  }
  func.func @transform_1(%arg0: i32, %arg1: i32, %arg2: i32) -> (i32, i32) {
    %c0_i32 = arith.constant 0 : i32
    return %arg1, %arg2 : i32, i32
  }
  func.func @transform_2(%arg0: i32, %arg1: i32, %arg2: i32) -> (i32, i32) {
    %c0_i32 = arith.constant 0 : i32
    return %arg1, %arg2 : i32, i32
  }
  func.func @transform_3(%arg0: i32, %arg1: i32, %arg2: i32) -> (i32, i32) {
    %c0_i32 = arith.constant 0 : i32
    %c0_i32_0 = arith.constant 0 : i32
    return %c0_i32, %arg2 : i32, i32
  }
  func.func @transform_4(%arg0: i32, %arg1: i32, %arg2: i32) -> (i32, i32) {
    %c0_i32 = arith.constant 0 : i32
    %c0_i32_0 = arith.constant 0 : i32
    return %arg1, %c0_i32 : i32, i32
  }
  func.func @transform_5(%arg0: i32, %arg1: i32, %arg2: i32) -> (i32, i32) {
    %c0_i32 = arith.constant 0 : i32
    %c0_i32_0 = arith.constant 0 : i32
    return %c0_i32, %arg1 : i32, i32
  }
  func.func @transform_6(%arg0: i32, %arg1: i32, %arg2: i32) -> (i32, i32) {
    %c0_i32 = arith.constant 0 : i32
    return %arg0, %arg1 : i32, i32
  }
}

</mosaic_0001>

<llo_original>
// kernel: tpu_custom_call.1
$region0: #{tpu_custom_call.1}
  #allocation0 [shape = 'u32[]', space=smem, size = 0x4, offset = 0x4, fixed_abs, tag = 'smem constant byte address 0x4 - core index']
  #allocation1 [shape = 'u32[72,128]{1,0:T(1,128)}', space=vmem, size = 0x9000, scoped, tag = 'internal scratch']
  %s0 = inlined_call_operand.vmem [shape: f32[8,256], index: 0, kind: input, shape index: {}]
  %s1 = inlined_call_operand.hbm [shape: f32[256,256], index: 1, kind: input, shape index: {}]
  %s2 = inlined_call_operand.hbm [shape: f32[256,256], index: 2, kind: input, shape index: {}]
  %s3 = inlined_call_operand.vmem [shape: f32[1,256], index: 3, kind: input, shape index: {}]
  %s4 = inlined_call_operand.vmem [shape: f32[256,1], index: 4, kind: input, shape index: {}]
  %s5 = inlined_call_operand.vmem [shape: f32[1,256], index: 5, kind: input, shape index: {}]
  %s6 = inlined_call_operand.hbm [shape: f32[8,256], index: 6, kind: output, shape index: {}]
  %s7 = sld [smem:[#allocation0]]
  $region73: #{tpu_custom_call.1} parent=0
    _
  %s9 = ssub.s32 1, %s7
  %s10 = scalar_select 0, %s9, %s7
  $region1: #{tpu_custom_call.1} parent=0
    #allocation2 [shape = 'u8[131072]{0}', space=vmem, size = 0x20000, scoped, tag = 'input window, operand 1']
    #allocation3 [shape = 's32[2]{0}', space=sflag, size = 0x8, scoped, tag = 'scoped memory for tpu_custom_call.1']
    #allocation4 [shape = 's32[2]{0}', space=sflag, size = 0x8, scoped, tag = 'scoped memory for tpu_custom_call.1']
    #allocation5 [shape = 'u8[131072]{0}', space=vmem, size = 0x20000, scoped, tag = 'input window, operand 2']
    #allocation6 [shape = 's32[2]{0}', space=sflag, size = 0x8, scoped, tag = 'scoped memory for tpu_custom_call.1']
    #allocation7 [shape = 'u8[8192]{0}', space=vmem, size = 0x2000, scoped, tag = 'output window, operand 0']
    %11 = vsyncpa [#allocation3], 0
    %s12 = scalar_lea.sflag [#allocation3], 1
    %13 = vsyncpa %s12, 0
    %14 = vsyncpa [#allocation6], 0
    %s15 = scalar_lea.sflag [#allocation6], 1
    %16 = vsyncpa %s15, 0
    %17 = vsyncpa [#allocation4], 0
    %s18 = scalar_lea.sflag [#allocation4], 1
    %19 = vsyncpa %s18, 0
    loop: start=0, step=1, limit=6
    $region2: #{tpu_custom_call.1} parent=1 // loop_pre_header
      _
    $region3: #{tpu_custom_call.1} parent=1 // loop_header
      %s21 = sphi 0, %s25
      %p22 = scmp.ge.s32.totalorder %s21, 6
      %s28 = sphi 0, %s47
      %s29 = sphi 0, %s43
      %s30 = sphi 0, %s39
      %s31 = sphi 0, %s28
      %s32 = sphi 0, %s29
      %s33 = sphi 0, %s30
      %s34 = sphi 0, %s31
      %s35 = sphi 0, %s32
      %s36 = sphi 0, %s33
      %s52 = sphi 0, %s54
      %s55 = sphi 0, %s52
      %s56 = sphi 0, %s55
      %s72 = sphi 0, %s56
      %s80 = sphi 0, %s82
      %s83 = sphi 0, %s80
      %s84 = sphi 0, %s83
      %s100 = sphi 0, %s84
      %s108 = sphi 0, %s110
      %s111 = sphi 0, %s108
      %s112 = sphi 0, %s111
      %s128 = sphi 0, %s112
      %s134 = sphi 0, %s136
      %s137 = sphi 0, %s134
      %s138 = sphi 0, %s137
      %s154 = sphi 0, %s138
      %s160 = sphi 0, %s162
      %s163 = sphi 0, %s160
      %s164 = sphi 0, %s163
      %s180 = sphi 0, %s164
      %s186 = sphi 0, %s188
      %s189 = sphi 0, %s186
      %s190 = sphi 0, %s189
      %s206 = sphi 0, %s190
      %s214 = sphi 0, %s216
      %s217 = sphi 0, %s214
      %s218 = sphi 0, %s217
      %s234 = sphi 0, %s218
    $region4: #{tpu_custom_call.1} parent=1 // loop_header_branch
      %24 = sbr.rel (%p22) target = $region8
    $region5: #{tpu_custom_call.1} parent=1 // loop_body
      %s26 = ssub.s32 %s21, 1
      %s27 = ssub.s32 %s21, 2
      %s37 = sadd.s32 1, %s30
      %p38 = scmp.ge.s32.totalorder %s37, 2
      %s39 = scalar_select %p38, 0, %s37
      %s40 = sadd.s32 1, %s29
      %s41 = scalar_select %p38, %s40, %s29
      %p42 = scmp.ge.s32.totalorder %s41, 2
      %s43 = scalar_select %p42, 0, %s41
      %s44 = sadd.s32 1, %s28
      %s45 = scalar_select %p42, %s44, %s28
      %p46 = scmp.ge.s32.totalorder %s45, 1
      %s47 = scalar_select %p46, 0, %s45
      %s48 = ssub.s32 %s28, %s47
      %s49 = ssub.s32 %s30, %s39
      %s50 = sor.u32 %s48, %s49
      %p51 = scmp.eq.s32.totalorder %s50, 0
      %s53 = sadd.s32 %s52, 1
      %s54 = scalar_select %p51, %s52, %s53
      %p57 = pneg %p51
      %p58 = scmp.eq.s32.totalorder %s21, 3
      %p59 = por %p57, %p58
      %p60 = scmp.ne.s32.totalorder %s52, %s55
      %p61 = scmp.eq.s32.totalorder %s21, 0
      %p62 = por %p60, %p61
      %p63 = scmp.ne.s32.totalorder %s52, %s55
      %p64 = scmp.eq.s32.totalorder %s26, 3
      %p65 = por %p63, %p64
      %p66 = scmp.ne.s32.totalorder %s55, %s56
      %p67 = scmp.eq.s32.totalorder %s26, 0
      %p68 = por %p66, %p67
      %p69 = scmp.ne.s32.totalorder %s55, %s56
      %p70 = scmp.eq.s32.totalorder %s27, 3
      %p71 = por %p69, %p70
      %p73 = scmp.ne.s32.totalorder %s56, %s72
      %p74 = scmp.eq.s32.totalorder %s27, 0
      %p75 = por %p73, %p74
      %s76 = ssub.s32 %s29, %s43
      %s77 = ssub.s32 %s30, %s39
      %s78 = sor.u32 %s76, %s77
      %p79 = scmp.eq.s32.totalorder %s78, 0
      %s81 = sadd.s32 %s80, 1
      %s82 = scalar_select %p79, %s80, %s81
      %p85 = pneg %p79
      %p86 = scmp.eq.s32.totalorder %s21, 3
      %p87 = por %p85, %p86
      %p88 = scmp.ne.s32.totalorder %s80, %s83
      %p89 = scmp.eq.s32.totalorder %s21, 0
      %p90 = por %p88, %p89
      %p91 = scmp.ne.s32.totalorder %s80, %s83
      %p92 = scmp.eq.s32.totalorder %s26, 3
      %p93 = por %p91, %p92
      %p94 = scmp.ne.s32.totalorder %s83, %s84
      %p95 = scmp.eq.s32.totalorder %s26, 0
      %p96 = por %p94, %p95
      %p97 = scmp.ne.s32.totalorder %s83, %s84
      %p98 = scmp.eq.s32.totalorder %s27, 3
      %p99 = por %p97, %p98
      %p101 = scmp.ne.s32.totalorder %s84, %s100
      %p102 = scmp.eq.s32.totalorder %s27, 0
      %p103 = por %p101, %p102
      %s104 = ssub.s32 %s29, %s43
      %s105 = ssub.s32 %s30, %s39
      %s106 = sor.u32 %s104, %s105
      %p107 = scmp.eq.s32.totalorder %s106, 0
      %s109 = sadd.s32 %s108, 1
      %s110 = scalar_select %p107, %s108, %s109
      %p113 = pneg %p107
      %p114 = scmp.eq.s32.totalorder %s21, 3
      %p115 = por %p113, %p114
      %p116 = scmp.ne.s32.totalorder %s108, %s111
      %p117 = scmp.eq.s32.totalorder %s21, 0
      %p118 = por %p116, %p117
      %p119 = scmp.ne.s32.totalorder %s108, %s111
      %p120 = scmp.eq.s32.totalorder %s26, 3
      %p121 = por %p119, %p120
      %p122 = scmp.ne.s32.totalorder %s111, %s112
      %p123 = scmp.eq.s32.totalorder %s26, 0
      %p124 = por %p122, %p123
      %p125 = scmp.ne.s32.totalorder %s111, %s112
      %p126 = scmp.eq.s32.totalorder %s27, 3
      %p127 = por %p125, %p126
      %p129 = scmp.ne.s32.totalorder %s112, %s128
      %p130 = scmp.eq.s32.totalorder %s27, 0
      %p131 = por %p129, %p130
      %s132 = ssub.s32 %s30, %s39
      %p133 = scmp.eq.s32.totalorder %s132, 0
      %s135 = sadd.s32 %s134, 1
      %s136 = scalar_select %p133, %s134, %s135
      %p139 = pneg %p133
      %p140 = scmp.eq.s32.totalorder %s21, 3
      %p141 = por %p139, %p140
      %p142 = scmp.ne.s32.totalorder %s134, %s137
      %p143 = scmp.eq.s32.totalorder %s21, 0
      %p144 = por %p142, %p143
      %p145 = scmp.ne.s32.totalorder %s134, %s137
      %p146 = scmp.eq.s32.totalorder %s26, 3
      %p147 = por %p145, %p146
      %p148 = scmp.ne.s32.totalorder %s137, %s138
      %p149 = scmp.eq.s32.totalorder %s26, 0
      %p150 = por %p148, %p149
      %p151 = scmp.ne.s32.totalorder %s137, %s138
      %p152 = scmp.eq.s32.totalorder %s27, 3
      %p153 = por %p151, %p152
      %p155 = scmp.ne.s32.totalorder %s138, %s154
      %p156 = scmp.eq.s32.totalorder %s27, 0
      %p157 = por %p155, %p156
      %s158 = ssub.s32 %s29, %s43
      %p159 = scmp.eq.s32.totalorder %s158, 0
      %s161 = sadd.s32 %s160, 1
      %s162 = scalar_select %p159, %s160, %s161
      %p165 = pneg %p159
      %p166 = scmp.eq.s32.totalorder %s21, 3
      %p167 = por %p165, %p166
      %p168 = scmp.ne.s32.totalorder %s160, %s163
      %p169 = scmp.eq.s32.totalorder %s21, 0
      %p170 = por %p168, %p169
      %p171 = scmp.ne.s32.totalorder %s160, %s163
      %p172 = scmp.eq.s32.totalorder %s26, 3
      %p173 = por %p171, %p172
      %p174 = scmp.ne.s32.totalorder %s163, %s164
      %p175 = scmp.eq.s32.totalorder %s26, 0
      %p176 = por %p174, %p175
      %p177 = scmp.ne.s32.totalorder %s163, %s164
      %p178 = scmp.eq.s32.totalorder %s27, 3
      %p179 = por %p177, %p178
      %p181 = scmp.ne.s32.totalorder %s164, %s180
      %p182 = scmp.eq.s32.totalorder %s27, 0
      %p183 = por %p181, %p182
      %s184 = ssub.s32 %s29, %s43
      %p185 = scmp.eq.s32.totalorder %s184, 0
      %s187 = sadd.s32 %s186, 1
      %s188 = scalar_select %p185, %s186, %s187
      %p191 = pneg %p185
      %p192 = scmp.eq.s32.totalorder %s21, 3
      %p193 = por %p191, %p192
      %p194 = scmp.ne.s32.totalorder %s186, %s189
      %p195 = scmp.eq.s32.totalorder %s21, 0
      %p196 = por %p194, %p195
      %p197 = scmp.ne.s32.totalorder %s186, %s189
      %p198 = scmp.eq.s32.totalorder %s26, 3
      %p199 = por %p197, %p198
      %p200 = scmp.ne.s32.totalorder %s189, %s190
      %p201 = scmp.eq.s32.totalorder %s26, 0
      %p202 = por %p200, %p201
      %p203 = scmp.ne.s32.totalorder %s189, %s190
      %p204 = scmp.eq.s32.totalorder %s27, 3
      %p205 = por %p203, %p204
      %p207 = scmp.ne.s32.totalorder %s190, %s206
      %p208 = scmp.eq.s32.totalorder %s27, 0
      %p209 = por %p207, %p208
      %s210 = ssub.s32 %s28, %s47
      %s211 = ssub.s32 %s29, %s43
      %s212 = sor.u32 %s210, %s211
      %p213 = scmp.eq.s32.totalorder %s212, 0
      %s215 = sadd.s32 %s214, 1
      %s216 = scalar_select %p213, %s214, %s215
      %p219 = pneg %p213
      %p220 = scmp.eq.s32.totalorder %s21, 3
      %p221 = por %p219, %p220
      %p222 = scmp.ne.s32.totalorder %s214, %s217
      %p223 = scmp.eq.s32.totalorder %s21, 0
      %p224 = por %p222, %p223
      %p225 = scmp.ne.s32.totalorder %s214, %s217
      %p226 = scmp.eq.s32.totalorder %s26, 3
      %p227 = por %p225, %p226
      %p228 = scmp.ne.s32.totalorder %s217, %s218
      %p229 = scmp.eq.s32.totalorder %s26, 0
      %p230 = por %p228, %p229
      %p231 = scmp.ne.s32.totalorder %s217, %s218
      %p232 = scmp.eq.s32.totalorder %s27, 3
      %p233 = por %p231, %p232
      %p235 = scmp.ne.s32.totalorder %s218, %s234
      %p236 = scmp.eq.s32.totalorder %s27, 0
      %p237 = por %p235, %p236
      %p238 = scmp.le.s32.totalorder 1, %s21
      %p239 = scmp.lt.s32.totalorder %s21, 5
      %p240 = pnand %p238, %p239
      %p241 = pneg %p240
      // Predicated region
      $region9: #{tpu_custom_call.1} parent=5 // pred_check
        _
      $region10: #{tpu_custom_call.1} parent=5 // pred_check_branch
        %243 = sbr.rel (%p240) target = $region12
      $region11: #{tpu_custom_call.1} parent=5 // pred_region
        %s244 = ssub.s32 %s21, 1
      $region12: #{tpu_custom_call.1} parent=5 // pred_fallthru
        _
      %p245 = scmp.lt.s32.totalorder %s21, 4
      // Predicated region
      $region13: #{tpu_custom_call.1} parent=5 // pred_check
        %p246 = pneg %p245
      $region14: #{tpu_custom_call.1} parent=5 // pred_check_branch
        %248 = sbr.rel (%p246) target = $region16
      $region15: #{tpu_custom_call.1} parent=5 // pred_region
        // Predicated region
        $region17: #{tpu_custom_call.1} parent=15 // pred_check
          %p249 = pneg %p62
        $region18: #{tpu_custom_call.1} parent=15 // pred_check_branch
          %251 = sbr.rel (%p249) target = $region20
        $region19: #{tpu_custom_call.1} parent=15 // pred_region
          %p252 = scmp.lt.s32.totalorder %s28, 0
          %s253 = scalar_select %p252, %s28, 0
          %p254 = scmp.lt.s32.totalorder %s30, 1
          %s255 = scalar_select %p254, %s30, 1
          %s256 = smul.addr %s253, 2
          %s257 = sadd.s32 %s255, %s256
          %s258 = smul.addr %s257, 8
          %s259 = scalar_lea.vmem %s0, %s258
        $region20: #{tpu_custom_call.1} parent=15 // pred_fallthru
          _
        // Predicated region
        $region21: #{tpu_custom_call.1} parent=15 // pred_check
          %p260 = pneg %p90
        $region22: #{tpu_custom_call.1} parent=15 // pred_check_branch
          %262 = sbr.rel (%p260) target = $region24
        $region23: #{tpu_custom_call.1} parent=15 // pred_region
          %s263 = sand.u32 %s80, 1
          %s264 = scalar_lea.sflag [#allocation3], %s263
          %s265 = sand.u32 %s80, 1
          %s266 = smul.addr %s265, 128
          %s267 = scalar_lea.vmem [#allocation2], %s266
          %s268 = smul.u32 16, %s29
          %270 = vsyncadd %s264, 0
          %s271 = smul.addr %s268, 2
          %s272 = sadd.s32 %s30, %s271
          %s273 = smul.addr %s272, 8
          %s274 = scalar_lea.hbm %s1, %s273
          %s275 = sshll.u32 %s274, 4
          %s276 = int_to_ptr.hbm [resolvable:$true] %s275
          %s277 = sshll.u32 %s267, 4
          %s278 = int_to_ptr.vmem [resolvable:$true] %s277
          %283 = dma.hbm_to_vmem [thread:$0]  %s276, 2048, %s278, %s264, 256, 128, 8
        $region24: #{tpu_custom_call.1} parent=15 // pred_fallthru
          _
        // Predicated region
        $region25: #{tpu_custom_call.1} parent=15 // pred_check
          %p284 = pneg %p118
        $region26: #{tpu_custom_call.1} parent=15 // pred_check_branch
          %286 = sbr.rel (%p284) target = $region28
        $region27: #{tpu_custom_call.1} parent=15 // pred_region
          %s287 = sand.u32 %s108, 1
          %s288 = scalar_lea.sflag [#allocation6], %s287
          %s289 = sand.u32 %s108, 1
          %s290 = smul.addr %s289, 128
          %s291 = scalar_lea.vmem [#allocation5], %s290
          %s292 = smul.u32 16, %s29
          %294 = vsyncadd %s288, 0
          %s295 = smul.addr %s292, 2
          %s296 = sadd.s32 %s30, %s295
          %s297 = smul.addr %s296, 8
          %s298 = scalar_lea.hbm %s2, %s297
          %s299 = sshll.u32 %s298, 4
          %s300 = int_to_ptr.hbm [resolvable:$true] %s299
          %s301 = sshll.u32 %s291, 4
          %s302 = int_to_ptr.vmem [resolvable:$true] %s301
          %307 = dma.hbm_to_vmem [thread:$0]  %s300, 2048, %s302, %s288, 256, 128, 8
        $region28: #{tpu_custom_call.1} parent=15 // pred_fallthru
          _
        // Predicated region
        $region29: #{tpu_custom_call.1} parent=15 // pred_check
          %p308 = pneg %p144
        $region30: #{tpu_custom_call.1} parent=15 // pred_check_branch
          %310 = sbr.rel (%p308) target = $region32
        $region31: #{tpu_custom_call.1} parent=15 // pred_region
          %p311 = scmp.lt.s32.totalorder %s30, 1
          %s312 = scalar_select %p311, %s30, 1
          %s313 = scalar_lea.vmem %s3, %s312
        $region32: #{tpu_custom_call.1} parent=15 // pred_fallthru
          _
        // Predicated region
        $region33: #{tpu_custom_call.1} parent=15 // pred_check
          %p314 = pneg %p170
        $region34: #{tpu_custom_call.1} parent=15 // pred_check_branch
          %316 = sbr.rel (%p314) target = $region36
        $region35: #{tpu_custom_call.1} parent=15 // pred_region
          %s317 = smul.u32 16, %s29
          %p318 = scmp.lt.s32.totalorder %s317, 31
          %s319 = scalar_select %p318, %s317, 31
          %s320 = smul.addr %s319, 8
          %s321 = scalar_lea.vmem %s4, %s320
          %s322 = smul.u32 16, %s29
        $region36: #{tpu_custom_call.1} parent=15 // pred_fallthru
          _
        // Predicated region
        $region37: #{tpu_custom_call.1} parent=15 // pred_check
          %p323 = pneg %p196
        $region38: #{tpu_custom_call.1} parent=15 // pred_check_branch
          %325 = sbr.rel (%p323) target = $region40
        $region39: #{tpu_custom_call.1} parent=15 // pred_region
          %p326 = scmp.lt.s32.totalorder %s29, 1
          %s327 = scalar_select %p326, %s29, 1
          %s328 = scalar_lea.vmem %s5, %s327
        $region40: #{tpu_custom_call.1} parent=15 // pred_fallthru
          _
      $region16: #{tpu_custom_call.1} parent=5 // pred_fallthru
        _
      %p329 = scmp.le.s32.totalorder 1, %s21
      %p330 = scmp.lt.s32.totalorder %s21, 5
      %p331 = pnand %p329, %p330
      %p332 = pneg %p331
      // Predicated region
      $region41: #{tpu_custom_call.1} parent=5 // pred_check
        _
      $region42: #{tpu_custom_call.1} parent=5 // pred_check_branch
        %334 = sbr.rel (%p331) target = $region44
      $region43: #{tpu_custom_call.1} parent=5 // pred_region
        %s335 = ssub.s32 %s21, 1
        %s336 = sand.u32 %s83, 1
        %s337 = scalar_lea.sflag [#allocation3], %s336
        %s338 = sand.u32 %s83, 1
        %s339 = smul.addr %s338, 128
        %s340 = scalar_lea.vmem [#allocation2], %s339
        // Predicated region
        $region45: #{tpu_custom_call.1} parent=43 // pred_check
          %p341 = pneg %p96
        $region46: #{tpu_custom_call.1} parent=43 // pred_check_branch
          %343 = sbr.rel (%p341) target = $region48
        $region47: #{tpu_custom_call.1} parent=43 // pred_region
          %345 = dma.done %s337, 2048
        $region48: #{tpu_custom_call.1} parent=43 // pred_fallthru
          _
        %s346 = sand.u32 %s111, 1
        %s347 = scalar_lea.sflag [#allocation6], %s346
        %s348 = sand.u32 %s111, 1
        %s349 = smul.addr %s348, 128
        %s350 = scalar_lea.vmem [#allocation5], %s349
        // Predicated region
        $region49: #{tpu_custom_call.1} parent=43 // pred_check
          %p351 = pneg %p124
        $region50: #{tpu_custom_call.1} parent=43 // pred_check_branch
          %353 = sbr.rel (%p351) target = $region52
        $region51: #{tpu_custom_call.1} parent=43 // pred_region
          %355 = dma.done %s347, 2048
        $region52: #{tpu_custom_call.1} parent=43 // pred_fallthru
          _
        %p356 = scmp.lt.s32.totalorder %s31, 0
        %s357 = scalar_select %p356, %s31, 0
        %p358 = scmp.lt.s32.totalorder %s33, 1
        %s359 = scalar_select %p358, %s33, 1
        %s360 = smul.addr %s357, 2
        %s361 = sadd.s32 %s359, %s360
        %s362 = smul.addr %s361, 8
        %s363 = scalar_lea.vmem %s0, %s362
        %p364 = pneg %p68
        %p365 = pneg %p65
        %s366 = sand.u32 %s83, 1
        %s367 = scalar_lea.sflag [#allocation3], %s366
        %s368 = sand.u32 %s83, 1
        %s369 = smul.addr %s368, 128
        %s370 = scalar_lea.vmem [#allocation2], %s369
        %p371 = pneg %p96
        %p372 = pneg %p93
        %s373 = sand.u32 %s111, 1
        %s374 = scalar_lea.sflag [#allocation6], %s373
        %s375 = sand.u32 %s111, 1
        %s376 = smul.addr %s375, 128
        %s377 = scalar_lea.vmem [#allocation5], %s376
        %p378 = pneg %p124
        %p379 = pneg %p121
        %p380 = scmp.lt.s32.totalorder %s33, 1
        %s381 = scalar_select %p380, %s33, 1
        %s382 = scalar_lea.vmem %s3, %s381
        %p383 = pneg %p150
        %p384 = pneg %p147
        %s385 = smul.u32 16, %s32
        %p386 = scmp.lt.s32.totalorder %s385, 31
        %s387 = scalar_select %p386, %s385, 31
        %s388 = smul.addr %s387, 8
        %s389 = scalar_lea.vmem %s4, %s388
        %p390 = pneg %p176
        %p391 = pneg %p173
        %p392 = scmp.lt.s32.totalorder %s32, 1
        %s393 = scalar_select %p392, %s32, 1
        %s394 = scalar_lea.vmem %s5, %s393
        %p395 = pneg %p202
        %p396 = pneg %p199
        %p397 = pneg %p230
        %p398 = pneg %p227
        %s399 = sand.u32 %s217, 1
        %s400 = scalar_lea.sflag [#allocation4], %s399
        %s401 = sand.u32 %s217, 1
        %s402 = smul.addr %s401, 8
        %s403 = scalar_lea.vmem [#allocation7], %s402
        %p404 = scmp.lt.s32.totalorder %s31, 0
        %s405 = scalar_select %p404, %s31, 0
        %p406 = scmp.lt.s32.totalorder %s33, 1
        %s407 = scalar_select %p406, %s33, 1
        %s408 = smul.addr %s405, 2
        %s409 = sadd.s32 %s407, %s408
        %s410 = smul.addr %s409, 8
        %s411 = scalar_lea.vmem %s0, %s410
        %s412 = smul.u32 16, %s32
        %s413 = smul.u32 16, %s32
        %p414 = scmp.lt.s32.totalorder %s33, 1
        %s415 = scalar_select %p414, %s33, 1
        %s416 = scalar_lea.vmem %s3, %s415
        %s417 = smul.u32 16, %s32
        %p418 = scmp.lt.s32.totalorder %s417, 31
        %s419 = scalar_select %p418, %s417, 31
        %s420 = smul.addr %s419, 8
        %s421 = scalar_lea.vmem %s4, %s420
        %s422 = smul.u32 16, %s32
        %p423 = scmp.lt.s32.totalorder %s32, 1
        %s424 = scalar_select %p423, %s32, 1
        %s425 = scalar_lea.vmem %s5, %s424
        %p426 = scmp.eq.s32.totalorder %s33, 0
        // Predicated region
        $region53: #{tpu_custom_call.1} parent=43 // pred_check
          %p427 = pneg %p426
        $region54: #{tpu_custom_call.1} parent=43 // pred_check_branch
          %429 = sbr.rel (%p427) target = $region56
        $region55: #{tpu_custom_call.1} parent=43 // pred_region
          %430 = vst [vmem:[%s403] sm:$0xff] 0.0
        $region56: #{tpu_custom_call.1} parent=43 // pred_fallthru
          _
        %v431 = vld [vmem:[%s421] sm:$0xff]
        %v432 = vld [vmem:[%s421 + $0x8] sm:$0xff]
        %v433 = vld [vmem:[%s421 + $0x10] sm:$0xff]
        %v434 = vld [vmem:[%s421 + $0x18] sm:$0xff]
        %v435 = vld [vmem:[%s421 + $0x20] sm:$0xff]
        %v436 = vld [vmem:[%s421 + $0x28] sm:$0xff]
        %v437 = vld [vmem:[%s421 + $0x30] sm:$0xff]
        %v438 = vld [vmem:[%s421 + $0x38] sm:$0xff]
        %v439 = vld [vmem:[%s421 + $0x40] sm:$0xff]
        %v440 = vld [vmem:[%s421 + $0x48] sm:$0xff]
        %v441 = vld [vmem:[%s421 + $0x50] sm:$0xff]
        %v442 = vld [vmem:[%s421 + $0x58] sm:$0xff]
        %v443 = vld [vmem:[%s421 + $0x60] sm:$0xff]
        %v444 = vld [vmem:[%s421 + $0x68] sm:$0xff]
        %v445 = vld [vmem:[%s421 + $0x70] sm:$0xff]
        %v446 = vld [vmem:[%s421 + $0x78] sm:$0xff]
        %v447 = vld [vmem:[%s416] sm:$0x1]
        %449 = vset.pattern.permute.xlu0 0
        %450 = vperm.xlu0 %449, %v431
        %v451 = vpop.permute.xlu0 %450
        %454 = vset.pattern.permute.xlu0 0
        %455 = vperm.xlu0 %454, %v432
        %v456 = vpop.permute.xlu0 %455
        %459 = vset.pattern.permute.xlu0 0
        %460 = vperm.xlu0 %459, %v433
        %v461 = vpop.permute.xlu0 %460
        %464 = vset.pattern.permute.xlu0 0
        %465 = vperm.xlu0 %464, %v434
        %v466 = vpop.permute.xlu0 %465
        %469 = vset.pattern.permute.xlu0 0
        %470 = vperm.xlu0 %469, %v435
        %v471 = vpop.permute.xlu0 %470
        %474 = vset.pattern.permute.xlu0 0
        %475 = vperm.xlu0 %474, %v436
        %v476 = vpop.permute.xlu0 %475
        %479 = vset.pattern.permute.xlu0 0
        %480 = vperm.xlu0 %479, %v437
        %v481 = vpop.permute.xlu0 %480
        %484 = vset.pattern.permute.xlu0 0
        %485 = vperm.xlu0 %484, %v438
        %v486 = vpop.permute.xlu0 %485
        %489 = vset.pattern.permute.xlu0 0
        %490 = vperm.xlu0 %489, %v439
        %v491 = vpop.permute.xlu0 %490
        %494 = vset.pattern.permute.xlu0 0
        %495 = vperm.xlu0 %494, %v440
        %v496 = vpop.permute.xlu0 %495
        %499 = vset.pattern.permute.xlu0 0
        %500 = vperm.xlu0 %499, %v441
        %v501 = vpop.permute.xlu0 %500
        %504 = vset.pattern.permute.xlu0 0
        %505 = vperm.xlu0 %504, %v442
        %v506 = vpop.permute.xlu0 %505
        %509 = vset.pattern.permute.xlu0 0
        %510 = vperm.xlu0 %509, %v443
        %v511 = vpop.permute.xlu0 %510
        %514 = vset.pattern.permute.xlu0 0
        %515 = vperm.xlu0 %514, %v444
        %v516 = vpop.permute.xlu0 %515
        %519 = vset.pattern.permute.xlu0 0
        %520 = vperm.xlu0 %519, %v445
        %v521 = vpop.permute.xlu0 %520
        %524 = vset.pattern.permute.xlu0 0
        %525 = vperm.xlu0 %524, %v446
        %v526 = vpop.permute.xlu0 %525
        %v529 = vperm.slane %v447, 0
        %v531 = vmul.f32 %v451, %v529
        %v532 = vmul.f32 %v456, %v529
        %v533 = vmul.f32 %v461, %v529
        %v534 = vmul.f32 %v466, %v529
        %v535 = vmul.f32 %v471, %v529
        %v536 = vmul.f32 %v476, %v529
        %v537 = vmul.f32 %v481, %v529
        %v538 = vmul.f32 %v486, %v529
        %v539 = vmul.f32 %v491, %v529
        %v540 = vmul.f32 %v496, %v529
        %v541 = vmul.f32 %v501, %v529
        %v542 = vmul.f32 %v506, %v529
        %v543 = vmul.f32 %v511, %v529
        %v544 = vmul.f32 %v516, %v529
        %v545 = vmul.f32 %v521, %v529
        %v546 = vmul.f32 %v526, %v529
        %v547 = vld [vmem:[%s340] sm:$0xff]
        %v548 = vld [vmem:[%s340 + $0x8] sm:$0xff]
        %v549 = vld [vmem:[%s340 + $0x10] sm:$0xff]
        %v550 = vld [vmem:[%s340 + $0x18] sm:$0xff]
        %v551 = vld [vmem:[%s340 + $0x20] sm:$0xff]
        %v552 = vld [vmem:[%s340 + $0x28] sm:$0xff]
        %v553 = vld [vmem:[%s340 + $0x30] sm:$0xff]
        %v554 = vld [vmem:[%s340 + $0x38] sm:$0xff]
        %v555 = vld [vmem:[%s340 + $0x40] sm:$0xff]
        %v556 = vld [vmem:[%s340 + $0x48] sm:$0xff]
        %v557 = vld [vmem:[%s340 + $0x50] sm:$0xff]
        %v558 = vld [vmem:[%s340 + $0x58] sm:$0xff]
        %v559 = vld [vmem:[%s340 + $0x60] sm:$0xff]
        %v560 = vld [vmem:[%s340 + $0x68] sm:$0xff]
        %v561 = vld [vmem:[%s340 + $0x70] sm:$0xff]
        %v562 = vld [vmem:[%s340 + $0x78] sm:$0xff]
        %v563 = vld [vmem:[%s350] sm:$0xff]
        %v564 = vld [vmem:[%s350 + $0x8] sm:$0xff]
        %v565 = vld [vmem:[%s350 + $0x10] sm:$0xff]
        %v566 = vld [vmem:[%s350 + $0x18] sm:$0xff]
        %v567 = vld [vmem:[%s350 + $0x20] sm:$0xff]
        %v568 = vld [vmem:[%s350 + $0x28] sm:$0xff]
        %v569 = vld [vmem:[%s350 + $0x30] sm:$0xff]
        %v570 = vld [vmem:[%s350 + $0x38] sm:$0xff]
        %v571 = vld [vmem:[%s350 + $0x40] sm:$0xff]
        %v572 = vld [vmem:[%s350 + $0x48] sm:$0xff]
        %v573 = vld [vmem:[%s350 + $0x50] sm:$0xff]
        %v574 = vld [vmem:[%s350 + $0x58] sm:$0xff]
        %v575 = vld [vmem:[%s350 + $0x60] sm:$0xff]
        %v576 = vld [vmem:[%s350 + $0x68] sm:$0xff]
        %v577 = vld [vmem:[%s350 + $0x70] sm:$0xff]
        %v578 = vld [vmem:[%s350 + $0x78] sm:$0xff]
        %v579 = vmul.f32 %v563, %v531
        %v580 = vmul.f32 %v564, %v532
        %v581 = vmul.f32 %v565, %v533
        %v582 = vmul.f32 %v566, %v534
        %v583 = vmul.f32 %v567, %v535
        %v584 = vmul.f32 %v568, %v536
        %v585 = vmul.f32 %v569, %v537
        %v586 = vmul.f32 %v570, %v538
        %v587 = vmul.f32 %v571, %v539
        %v588 = vmul.f32 %v572, %v540
        %v589 = vmul.f32 %v573, %v541
        %v590 = vmul.f32 %v574, %v542
        %v591 = vmul.f32 %v575, %v543
        %v592 = vmul.f32 %v576, %v544
        %v593 = vmul.f32 %v577, %v545
        %v594 = vmul.f32 %v578, %v546
        %v595 = vadd.f32 %v547, %v579
        %v596 = vadd.f32 %v548, %v580
        %v597 = vadd.f32 %v549, %v581
        %v598 = vadd.f32 %v550, %v582
        %v599 = vadd.f32 %v551, %v583
        %v600 = vadd.f32 %v552, %v584
        %v601 = vadd.f32 %v553, %v585
        %v602 = vadd.f32 %v554, %v586
        %v603 = vadd.f32 %v555, %v587
        %v604 = vadd.f32 %v556, %v588
        %v605 = vadd.f32 %v557, %v589
        %v606 = vadd.f32 %v558, %v590
        %v607 = vadd.f32 %v559, %v591
        %v608 = vadd.f32 %v560, %v592
        %v609 = vadd.f32 %v561, %v593
        %v610 = vadd.f32 %v562, %v594
        %v611 = vld [vmem:[%s403] sm:$0xff]
        %v612 = vld [vmem:[%s411] sm:$0xff]
        %613 = vmatpush.xpose.msra.mxu0 %v610
        %614 = vmatpush.xpose.msra.mxu0 %v609
        %615 = vmatpush.xpose.msra.mxu0 %v608
        %616 = vmatpush.xpose.msra.mxu0 %v607
        %617 = vmatpush.xpose.msra.mxu0 %v606
        %618 = vmatpush.xpose.msra.mxu0 %v605
        %619 = vmatpush.xpose.msra.mxu0 %v604
        %620 = vmatpush.xpose.msra.mxu0 %v603
        %621 = vmatpush.xpose.msra.mxu0 %v602
        %622 = vmatpush.xpose.msra.mxu0 %v601
        %623 = vmatpush.xpose.msra.mxu0 %v600
        %624 = vmatpush.xpose.msra.mxu0 %v599
        %625 = vmatpush.xpose.msra.mxu0 %v598
        %626 = vmatpush.xpose.msra.mxu0 %v597
        %627 = vmatpush.xpose.msra.mxu0 %v596
        %628 = vmatpush.xpose.msra.mxu0 %v595
        %629 = vmatmul.f32.gmra.mxu0 %v612
        %v630 = vpop.f32.mrf.mxu0
        %v631 = vadd.f32 0.0, %v630
        %632 = vdwg.mxu0
        %v633 = vadd.f32 %v611, %v631
        %634 = vst [vmem:[%s403] sm:$0xff] %v633
        %p635 = scmp.eq.s32.totalorder %s33, 1
        // Predicated region
        $region57: #{tpu_custom_call.1} parent=43 // pred_check
          %p636 = pneg %p635
        $region58: #{tpu_custom_call.1} parent=43 // pred_check_branch
          %638 = sbr.rel (%p636) target = $region60
        $region59: #{tpu_custom_call.1} parent=43 // pred_region
          %v639 = vld [vmem:[%s403] sm:$0xff]
          %v640 = vld [vmem:[%s425] sm:$0x1]
          %v642 = vperm.slane %v640, 0
          %v644 = vadd.f32 %v639, %v642
          %645 = vst [vmem:[%s403] sm:$0xff] %v644
        $region60: #{tpu_custom_call.1} parent=43 // pred_fallthru
          _
        %s646 = sand.u32 %s217, 1
        %s647 = scalar_lea.sflag [#allocation4], %s646
        %s648 = sand.u32 %s217, 1
        %s649 = smul.addr %s648, 8
        %s650 = scalar_lea.vmem [#allocation7], %s649
        // Predicated region
        $region61: #{tpu_custom_call.1} parent=43 // pred_check
          %p651 = pneg %p227
        $region62: #{tpu_custom_call.1} parent=43 // pred_check_branch
          %653 = sbr.rel (%p651) target = $region64
        $region63: #{tpu_custom_call.1} parent=43 // pred_region
          %655 = vsyncadd %s647, 0
          %s656 = smul.addr %s31, 2
          %s657 = sadd.s32 %s32, %s656
          %s658 = smul.addr %s657, 8
          %s659 = scalar_lea.hbm %s6, %s658
          %s661 = sshll.u32 %s650, 4
          %s662 = int_to_ptr.vmem [resolvable:$true] %s661
          %s663 = sshll.u32 %s659, 4
          %s664 = int_to_ptr.hbm [resolvable:$true] %s663
          %666 = dma.vmem_to_hbm [thread:$0]  %s662, 128, %s664, %s647
        $region64: #{tpu_custom_call.1} parent=43 // pred_fallthru
          _
      $region44: #{tpu_custom_call.1} parent=5 // pred_fallthru
        _
      %p667 = scmp.le.s32.totalorder 2, %s21
      // Predicated region
      $region65: #{tpu_custom_call.1} parent=5 // pred_check
        %p668 = pneg %p667
      $region66: #{tpu_custom_call.1} parent=5 // pred_check_branch
        %670 = sbr.rel (%p668) target = $region68
      $region67: #{tpu_custom_call.1} parent=5 // pred_region
        %s671 = ssub.s32 %s21, 2
        // Predicated region
        $region69: #{tpu_custom_call.1} parent=67 // pred_check
          %p672 = pneg %p233
        $region70: #{tpu_custom_call.1} parent=67 // pred_check_branch
          %674 = sbr.rel (%p672) target = $region72
        $region71: #{tpu_custom_call.1} parent=67 // pred_region
          %s675 = sand.u32 %s218, 1
          %s676 = scalar_lea.sflag [#allocation4], %s675
          %s677 = sand.u32 %s218, 1
          %s678 = smul.addr %s677, 8
          %s679 = scalar_lea.vmem [#allocation7], %s678
          %681 = dma.done %s676, 128
        $region72: #{tpu_custom_call.1} parent=67 // pred_fallthru
          _
      $region68: #{tpu_custom_call.1} parent=5 // pred_fallthru
        _
    $region6: #{tpu_custom_call.1} parent=1 // loop_footer
      %s25 = sadd.s32 1, %s21
    $region7: #{tpu_custom_call.1} parent=1 // loop_footer_branch
      %20 = sbr.rel target = $region3
    $region8: #{tpu_custom_call.1} parent=1 // loop_exit
      _
    %682 = vsyncpa [#allocation3], 1
    %s683 = scalar_lea.sflag [#allocation3], 1
    %684 = vsyncpa %s683, 1
    %685 = vsyncpa [#allocation6], 1
    %s686 = scalar_lea.sflag [#allocation6], 1
    %687 = vsyncpa %s686, 1
    %688 = vsyncpa [#allocation4], 1
    %s689 = scalar_lea.sflag [#allocation4], 1
    %690 = vsyncpa %s689, 1

</llo_original>
